<compile_context>
chip_gen: v7x
topology: tpu7x:2x2x1
jax: 0.10.0
libtpu: 0.0.40
codegen_flags: <defaults>
</compile_context>

<pallas_src>
import jax
import jax.numpy as jnp
from jax.experimental import pallas as pl
from jax.experimental.pallas import tpu as pltpu


def sin_kernel(freq_ref, x_ref, o_ref):
    # freq_ref: (1, td), x_ref/o_ref: (tb, td).
    # Broadcast multiply on the VPU, sin on the EUP, full-tile store.
    o_ref[...] = jnp.sin(freq_ref[...] * x_ref[...])


def _round_up(v, m):
    return ((v + m - 1) // m) * m


def _sublane_multiple(dtype):
    # Minimum sublane tile per dtype: 8 rows (32-bit), 16 (16-bit), 32 (8-bit).
    return {4: 8, 2: 16, 1: 32}.get(jnp.dtype(dtype).itemsize, 8)


def sin_module(x, freq, *, target_block_bytes=4 << 20):
    """sin(freq * x) with freq of shape (1, D) broadcast over the batch of x (B, D)."""
    B, D = x.shape
    assert freq.shape == (1, D)
    itemsize = jnp.dtype(x.dtype).itemsize
    sub = _sublane_multiple(x.dtype)

    # ---- tile selection ------------------------------------------------------------
    # Lane-dense D tile; cover the full row when it fits the per-block budget so each
    # block is one contiguous HBM slab (cap at 8192 lanes).
    td = min(_round_up(D, 128), 8192)
    tb = max(sub, ((target_block_bytes // (td * itemsize)) // sub) * sub)
    tb = min(tb, _round_up(B, sub))

    # v7x has 2 TensorCores: make sure there are >= 2 grid steps on a parallel axis
    # whenever the input is big enough to split.
    if pl.cdiv(B, tb) == 1 and pl.cdiv(D, td) == 1:
        if B > sub:
            tb = _round_up(pl.cdiv(B, 2), sub)
        elif D > 128:
            td = _round_up(pl.cdiv(D, 2), 128)

    grid = (pl.cdiv(B, tb), pl.cdiv(D, td))   # ragged edges handled by Pallas

    block_bytes = tb * td * itemsize
    # Double-buffered x-in + out blocks plus tiny freq blocks, with headroom.
    # >= 32 MiB (v5e's scoped default is only 16 MiB), <= 48 MiB (safe on v7x's
    # 64 MiB physical VMEM).
    vmem_limit = int(min(48 << 20, max(32 << 20, 6 * block_bytes)))

    return pl.pallas_call(
        sin_kernel,
        out_shape=jax.ShapeDtypeStruct((B, D), x.dtype),
        grid=grid,
        in_specs=[
            # freq: same (1, td) block for every batch tile (grid-invariant in i).
            pl.BlockSpec((1, td), lambda i, j: (0, j)),
            pl.BlockSpec((tb, td), lambda i, j: (i, j)),
        ],
        out_specs=pl.BlockSpec((tb, td), lambda i, j: (i, j)),
        compiler_params=pltpu.CompilerParams(
            dimension_semantics=("parallel", "parallel"),
            vmem_limit_bytes=vmem_limit,
        ),
        cost_estimate=pl.CostEstimate(
            flops=B * D,                      # one multiply per element
            transcendentals=B * D,            # one sin per element
            bytes_accessed=(2 * B * D + D) * itemsize,
        ),
    )(freq, x)


if __name__ == "__main__":
    key = jax.random.PRNGKey(0)

    # Small shapes consistent with the module; intentionally NOT multiples of
    # (8, 128) so the ragged-edge-block path is exercised.
    B, D = 12, 200
    w = 10.0  # Sin(dim=D, w=10) -> freq initialized to w * ones(1, dim)

    freq = w * jnp.ones((1, D), dtype=jnp.float32)
    x = jax.random.normal(key, (B, D), dtype=jnp.float32)

    out = sin_module(x, freq)
    out = jax.block_until_ready(out)

    # Sanity check against the plain-JAX reference.
    ref = jnp.sin(freq * x)
    assert out.shape == (B, D)
    assert jnp.allclose(out, ref, atol=1e-5, rtol=1e-5)

    print("KERNEL_OK")
</pallas_src>

<mosaic_0001>
module attributes {stable_mosaic.version = 11 : i64} {
  func.func @sin_kernel(%arg0: i32, %arg1: i32, %arg2: memref<1x256xf32, #tpu.memory_space<vmem>>, %arg3: memref<8x256xf32, #tpu.memory_space<vmem>>, %arg4: memref<8x256xf32, #tpu.memory_space<vmem>>) attributes {dimension_semantics = [#tpu.dimension_semantics<parallel>, #tpu.dimension_semantics<parallel>], iteration_bounds = array<i64: 2, 1>, scalar_prefetch = 0 : i64, scratch_operands = 0 : i64, tpu.core_type = #tpu.core_type<tc>, window_params = [{transform_indices = @transform_0, window_bounds = array<i64: 1, 256>}, {transform_indices = @transform_1, window_bounds = array<i64: 8, 256>}, {transform_indices = @transform_2, window_bounds = array<i64: 8, 256>}]} {
    %c0 = arith.constant 0 : index
    %c0_0 = arith.constant 0 : index
    %0 = vector.load %arg2[%c0, %c0_0] : memref<1x256xf32, #tpu.memory_space<vmem>>, vector<1x256xf32>
    %c0_1 = arith.constant 0 : index
    %c0_2 = arith.constant 0 : index
    %1 = vector.load %arg3[%c0_1, %c0_2] : memref<8x256xf32, #tpu.memory_space<vmem>>, vector<8x256xf32>
    %2 = vector.broadcast %0 : vector<1x256xf32> to vector<8x256xf32>
    %3 = arith.mulf %2, %1 : vector<8x256xf32>
    %4 = math.sin %3 : vector<8x256xf32>
    %c0_3 = arith.constant 0 : index
    %c0_4 = arith.constant 0 : index
    %5 = vector.load %arg4[%c0_3, %c0_4] : memref<8x256xf32, #tpu.memory_space<vmem>>, vector<8x256xf32>
    tpu.vector_store %arg4[%c0_3, %c0_4], %4 {strides = array<i32>} : memref<8x256xf32, #tpu.memory_space<vmem>>, vector<8x256xf32>,
    return
  }
  func.func @transform_0(%arg0: i32, %arg1: i32) -> (i32, i32) {
    %c0_i32 = arith.constant 0 : i32
    %c0_i32_0 = arith.constant 0 : i32
    return %c0_i32, %arg1 : i32, i32
  }
  func.func @transform_1(%arg0: i32, %arg1: i32) -> (i32, i32) {
    %c0_i32 = arith.constant 0 : i32
    return %arg0, %arg1 : i32, i32
  }
  func.func @transform_2(%arg0: i32, %arg1: i32) -> (i32, i32) {
    %c0_i32 = arith.constant 0 : i32
    return %arg0, %arg1 : i32, i32
  }
}

</mosaic_0001>

<llo_original>
// kernel: tpu_custom_call.1
$region0: #{tpu_custom_call.1}
  #allocation0 [shape = 'u32[]', space=smem, size = 0x4, offset = 0x4, fixed_abs, tag = 'smem constant byte address 0x4 - core index']
  #allocation1 [shape = 'u32[144,128]{1,0:T(1,128)}', space=vmem, size = 0x12000, scoped, tag = 'internal scratch']
  %s0 = inlined_call_operand.hbm [shape: f32[1,200], index: 0, kind: input, shape index: {}]
  %s1 = inlined_call_operand.hbm [shape: f32[12,200], index: 1, kind: input, shape index: {}]
  %s2 = inlined_call_operand.hbm [shape: f32[12,200], index: 2, kind: output, shape index: {}]
  %s3 = sld [smem:[#allocation0]]
  $region49: #{tpu_custom_call.1} parent=0
    _
  %s5 = ssub.s32 1, %s3
  %s6 = scalar_select 0, %s5, %s3
  $region1: #{tpu_custom_call.1} parent=0
    #allocation2 [shape = 'u8[1024]{0}', space=vmem, size = 0x400, scoped, tag = 'input window, operand 0, single buffered']
    #allocation3 [shape = 's32[2]{0}', space=sflag, size = 0x8, scoped, tag = 'scoped memory for tpu_custom_call.1']
    #allocation4 [shape = 's32[2]{0}', space=sflag, size = 0x8, scoped, tag = 'scoped memory for tpu_custom_call.1']
    #allocation5 [shape = 'u8[16384]{0}', space=vmem, size = 0x4000, scoped, tag = 'input window, operand 1']
    #allocation6 [shape = 's32[2]{0}', space=sflag, size = 0x8, scoped, tag = 'scoped memory for tpu_custom_call.1']
    #allocation7 [shape = 'u8[16384]{0}', space=vmem, size = 0x4000, scoped, tag = 'output window, operand 0']
    %7 = vsyncpa [#allocation3], 0
    %8 = vsyncpa [#allocation6], 0
    %s9 = scalar_lea.sflag [#allocation6], 1
    %10 = vsyncpa %s9, 0
    %11 = vsyncpa [#allocation4], 0
    %s12 = scalar_lea.sflag [#allocation4], 1
    %13 = vsyncpa %s12, 0
    loop: start=0, step=1, limit=4
    $region2: #{tpu_custom_call.1} parent=1 // loop_pre_header
      _
    $region3: #{tpu_custom_call.1} parent=1 // loop_header
      %s15 = sphi 0, %s19
      %p16 = scmp.ge.s32.totalorder %s15, 4
      %s22 = sphi 0, %s34
      %s23 = sphi 0, %s30
      %s24 = sphi 0, %s22
      %s25 = sphi 0, %s23
      %s26 = sphi 0, %s24
      %s27 = sphi 0, %s25
      %s37 = sphi 0, %s39
      %s40 = sphi 0, %s37
      %s41 = sphi 0, %s40
      %s57 = sphi 0, %s41
      %s65 = sphi 0, %s67
      %s68 = sphi 0, %s65
      %s69 = sphi 0, %s68
      %s85 = sphi 0, %s69
      %s93 = sphi 0, %s95
      %s96 = sphi 0, %s93
      %s97 = sphi 0, %s96
      %s113 = sphi 0, %s97
    $region4: #{tpu_custom_call.1} parent=1 // loop_header_branch
      %18 = sbr.rel (%p16) target = $region8
    $region5: #{tpu_custom_call.1} parent=1 // loop_body
      %s20 = ssub.s32 %s15, 1
      %s21 = ssub.s32 %s15, 2
      %s28 = sadd.s32 1, %s23
      %p29 = scmp.ge.s32.totalorder %s28, 1
      %s30 = scalar_select %p29, 0, %s28
      %s31 = sadd.s32 1, %s22
      %s32 = scalar_select %p29, %s31, %s22
      %p33 = scmp.ge.s32.totalorder %s32, 2
      %s34 = scalar_select %p33, 0, %s32
      %s35 = ssub.s32 %s23, %s30
      %p36 = scmp.eq.s32.totalorder %s35, 0
      %s38 = sadd.s32 %s37, 1
      %s39 = scalar_select %p36, %s37, %s38
      %p42 = pneg %p36
      %p43 = scmp.eq.s32.totalorder %s15, 1
      %p44 = por %p42, %p43
      %p45 = scmp.ne.s32.totalorder %s37, %s40
      %p46 = scmp.eq.s32.totalorder %s15, 0
      %p47 = por %p45, %p46
      %p48 = scmp.ne.s32.totalorder %s37, %s40
      %p49 = scmp.eq.s32.totalorder %s20, 1
      %p50 = por %p48, %p49
      %p51 = scmp.ne.s32.totalorder %s40, %s41
      %p52 = scmp.eq.s32.totalorder %s20, 0
      %p53 = por %p51, %p52
      %p54 = scmp.ne.s32.totalorder %s40, %s41
      %p55 = scmp.eq.s32.totalorder %s21, 1
      %p56 = por %p54, %p55
      %p58 = scmp.ne.s32.totalorder %s41, %s57
      %p59 = scmp.eq.s32.totalorder %s21, 0
      %p60 = por %p58, %p59
      %s61 = ssub.s32 %s22, %s34
      %s62 = ssub.s32 %s23, %s30
      %s63 = sor.u32 %s61, %s62
      %p64 = scmp.eq.s32.totalorder %s63, 0
      %s66 = sadd.s32 %s65, 1
      %s67 = scalar_select %p64, %s65, %s66
      %p70 = pneg %p64
      %p71 = scmp.eq.s32.totalorder %s15, 1
      %p72 = por %p70, %p71
      %p73 = scmp.ne.s32.totalorder %s65, %s68
      %p74 = scmp.eq.s32.totalorder %s15, 0
      %p75 = por %p73, %p74
      %p76 = scmp.ne.s32.totalorder %s65, %s68
      %p77 = scmp.eq.s32.totalorder %s20, 1
      %p78 = por %p76, %p77
      %p79 = scmp.ne.s32.totalorder %s68, %s69
      %p80 = scmp.eq.s32.totalorder %s20, 0
      %p81 = por %p79, %p80
      %p82 = scmp.ne.s32.totalorder %s68, %s69
      %p83 = scmp.eq.s32.totalorder %s21, 1
      %p84 = por %p82, %p83
      %p86 = scmp.ne.s32.totalorder %s69, %s85
      %p87 = scmp.eq.s32.totalorder %s21, 0
      %p88 = por %p86, %p87
      %s89 = ssub.s32 %s22, %s34
      %s90 = ssub.s32 %s23, %s30
      %s91 = sor.u32 %s89, %s90
      %p92 = scmp.eq.s32.totalorder %s91, 0
      %s94 = sadd.s32 %s93, 1
      %s95 = scalar_select %p92, %s93, %s94
      %p98 = pneg %p92
      %p99 = scmp.eq.s32.totalorder %s15, 1
      %p100 = por %p98, %p99
      %p101 = scmp.ne.s32.totalorder %s93, %s96
      %p102 = scmp.eq.s32.totalorder %s15, 0
      %p103 = por %p101, %p102
      %p104 = scmp.ne.s32.totalorder %s93, %s96
      %p105 = scmp.eq.s32.totalorder %s20, 1
      %p106 = por %p104, %p105
      %p107 = scmp.ne.s32.totalorder %s96, %s97
      %p108 = scmp.eq.s32.totalorder %s20, 0
      %p109 = por %p107, %p108
      %p110 = scmp.ne.s32.totalorder %s96, %s97
      %p111 = scmp.eq.s32.totalorder %s21, 1
      %p112 = por %p110, %p111
      %p114 = scmp.ne.s32.totalorder %s97, %s113
      %p115 = scmp.eq.s32.totalorder %s21, 0
      %p116 = por %p114, %p115
      %p117 = scmp.le.s32.totalorder 1, %s15
      %p118 = scmp.lt.s32.totalorder %s15, 3
      %p119 = pnand %p117, %p118
      %p120 = pneg %p119
      // Predicated region
      $region9: #{tpu_custom_call.1} parent=5 // pred_check
        _
      $region10: #{tpu_custom_call.1} parent=5 // pred_check_branch
        %122 = sbr.rel (%p119) target = $region12
      $region11: #{tpu_custom_call.1} parent=5 // pred_region
        %s123 = ssub.s32 %s15, 1
        // Predicated region
        $region13: #{tpu_custom_call.1} parent=11 // pred_check
          %p124 = pneg %p53
        $region14: #{tpu_custom_call.1} parent=11 // pred_check_branch
          %126 = sbr.rel (%p124) target = $region16
        $region15: #{tpu_custom_call.1} parent=11 // pred_region
          %s127 = smul.u32 2, %s25
          %s129 = ssub.s32 32, 32
          %130 = vsyncadd [#allocation3], %s129
          %s131 = smul.addr %s127, 16
          %s132 = scalar_lea.hbm %s0, %s131
          %s134 = sshll.u32 [#allocation2], 4
          %s135 = int_to_ptr.vmem [resolvable:$true] %s134
          %137 = dma.hbm_to_vmem [thread:$0]  %s132, 32, %s135, [#allocation3]
        $region16: #{tpu_custom_call.1} parent=11 // pred_fallthru
          _
      $region12: #{tpu_custom_call.1} parent=5 // pred_fallthru
        _
      %p138 = scmp.lt.s32.totalorder %s15, 2
      // Predicated region
      $region17: #{tpu_custom_call.1} parent=5 // pred_check
        %p139 = pneg %p138
      $region18: #{tpu_custom_call.1} parent=5 // pred_check_branch
        %141 = sbr.rel (%p139) target = $region20
      $region19: #{tpu_custom_call.1} parent=5 // pred_region
        // Predicated region
        $region21: #{tpu_custom_call.1} parent=19 // pred_check
          %p142 = pneg %p75
        $region22: #{tpu_custom_call.1} parent=19 // pred_check_branch
          %144 = sbr.rel (%p142) target = $region24
        $region23: #{tpu_custom_call.1} parent=19 // pred_region
          %s145 = sand.u32 %s65, 1
          %s146 = scalar_lea.sflag [#allocation6], %s145
          %s147 = sand.u32 %s65, 1
          %s148 = smul.addr %s147, 16
          %s149 = scalar_lea.vmem [#allocation5], %s148
          %s150 = smul.u32 2, %s23
          %s152 = ssub.s32 256, 256
          %153 = vsyncadd %s146, %s152
          %s154 = smul.addr %s22, 2
          %s155 = sadd.s32 %s150, %s154
          %s156 = smul.addr %s155, 128
          %s157 = scalar_lea.hbm %s1, %s156
          %s159 = sshll.u32 %s149, 4
          %s160 = int_to_ptr.vmem [resolvable:$true] %s159
          %162 = dma.hbm_to_vmem [thread:$0]  %s157, 256, %s160, %s146
        $region24: #{tpu_custom_call.1} parent=19 // pred_fallthru
          _
      $region20: #{tpu_custom_call.1} parent=5 // pred_fallthru
        _
      %p163 = scmp.le.s32.totalorder 1, %s15
      %p164 = scmp.lt.s32.totalorder %s15, 3
      %p165 = pnand %p163, %p164
      %p166 = pneg %p165
      // Predicated region
      $region25: #{tpu_custom_call.1} parent=5 // pred_check
        _
      $region26: #{tpu_custom_call.1} parent=5 // pred_check_branch
        %168 = sbr.rel (%p165) target = $region28
      $region27: #{tpu_custom_call.1} parent=5 // pred_region
        %s169 = ssub.s32 %s15, 1
        // Predicated region
        $region29: #{tpu_custom_call.1} parent=27 // pred_check
          %p170 = pneg %p53
        $region30: #{tpu_custom_call.1} parent=27 // pred_check_branch
          %172 = sbr.rel (%p170) target = $region32
        $region31: #{tpu_custom_call.1} parent=27 // pred_region
          %173 = dma.done [#allocation3], 32
        $region32: #{tpu_custom_call.1} parent=27 // pred_fallthru
          _
        %s174 = sand.u32 %s68, 1
        %s175 = scalar_lea.sflag [#allocation6], %s174
        %s176 = sand.u32 %s68, 1
        %s177 = smul.addr %s176, 16
        %s178 = scalar_lea.vmem [#allocation5], %s177
        // Predicated region
        $region33: #{tpu_custom_call.1} parent=27 // pred_check
          %p179 = pneg %p81
        $region34: #{tpu_custom_call.1} parent=27 // pred_check_branch
          %181 = sbr.rel (%p179) target = $region36
        $region35: #{tpu_custom_call.1} parent=27 // pred_region
          %182 = dma.done %s175, 256
        $region36: #{tpu_custom_call.1} parent=27 // pred_fallthru
          _
        %p183 = pneg %p53
        %p184 = pneg %p50
        %s185 = sand.u32 %s68, 1
        %s186 = scalar_lea.sflag [#allocation6], %s185
        %s187 = sand.u32 %s68, 1
        %s188 = smul.addr %s187, 16
        %s189 = scalar_lea.vmem [#allocation5], %s188
        %p190 = pneg %p81
        %p191 = pneg %p78
        %p192 = pneg %p109
        %p193 = pneg %p106
        %s194 = sand.u32 %s96, 1
        %s195 = scalar_lea.sflag [#allocation4], %s194
        %s196 = sand.u32 %s96, 1
        %s197 = smul.addr %s196, 16
        %s198 = scalar_lea.vmem [#allocation7], %s197
        %s199 = smul.u32 2, %s25
        %s200 = smul.u32 2, %s25
        %s201 = smul.u32 2, %s25
        %v202 = vld [vmem:[#allocation2] sm:$0x3]
        %v203 = vld [vmem:[%s178] sm:$0xff]
        %v204 = vld [vmem:[%s178 + $0x8] sm:$0xff]
        %v206 = vlaneseq
        %v207 = vshrl.u32 %v206, 7
        %v208 = vsub.s32 0, %v207
        %v209 = vrot.slane %v202, %v208
        %v210 = vlaneseq
        %v211 = vshrl.u32 %v210, 7
        %v212 = vsub.s32 1, %v211
        %v213 = vrot.slane %v202, %v212
        %v216 = vmul.f32 %v209, %v203
        %v217 = vmul.f32 %v213, %v204
        %v218 = vand.u32 2147483647, %v216
        %vm219 = vcmp.le.f32.partialorder %v218, 0.7853982
        %vm220 = vcmp.lt.s32.totalorder %v216, 0
        %v221 = vand.u32 %v216, 2139095040
        %v222 = vshrl.u32 %v221, 23
        %v223 = vsub.s32 %v222, 127
        %v224 = vand.u32 2147483647, %v216
        %v225 = vand.u32 %v224, 8388607
        %v226 = vor.u32 %v225, 8388608
        %v227 = vsub.s32 0, %v226
        %v228 = vadd.s32 %v223, 1
        %vm229 = vcmp.gt.s32.totalorder %v228, 0
        %v230 = vsel %vm229, %v228, 0
        %v231 = vshrl.u32 %v230, 5
        %v232 = vand.u32 %v230, 31
        %v233 = vsub.s32 32, %v232
        %v234 = vshrl.u32 683565275, %v233
        %v235 = vshll.u32 683565275, %v232
        %v236 = vshrl.u32 2475754826, %v233
        %v237 = vor.u32 %v235, %v236
        %v238 = vshll.u32 2475754826, %v232
        %v239 = vshrl.u32 2131351028, %v233
        %v240 = vor.u32 %v238, %v239
        %v241 = vshll.u32 2131351028, %v232
        %v242 = vshrl.u32 2102212464, %v233
        %v243 = vor.u32 %v241, %v242
        %v244 = vshll.u32 2102212464, %v232
        %v245 = vshrl.u32 920167782, %v233
        %v246 = vor.u32 %v244, %v245
        %v247 = vshll.u32 920167782, %v232
        %v248 = vshrl.u32 1326507024, %v233
        %v249 = vor.u32 %v247, %v248
        %vm250 = vcmp.lt.s32.totalorder %v231, 1
        %vm251 = vcmp.lt.s32.totalorder %v231, 2
        %vm252 = vcmp.lt.s32.totalorder %v231, 3
        %vm253 = vcmp.lt.s32.totalorder %v231, 4
        %v254 = vsel %vm250, %v234, %v237
        %v255 = vsel %vm253, %v243, 2102212464
        %v256 = vsel %vm252, %v240, %v255
        %v257 = vsel %vm251, %v254, %v256
        %v258 = vsel %vm250, %v237, %v240
        %v259 = vsel %vm253, %v246, 920167782
        %v260 = vsel %vm252, %v243, %v259
        %v261 = vsel %vm251, %v258, %v260
        %v262 = vsel %vm250, %v240, %v243
        %v263 = vsel %vm253, %v249, 1326507024
        %v264 = vsel %vm252, %v246, %v263
        %v265 = vsel %vm251, %v262, %v264
        %v266 = vshll.u32 %v226, 8
        %v267 = vmul.u32.u64.compose %v266, %v265
        %v268 = vextract.low.u32 %v267
        %v269 = vextract.high.u32 %v267
        %v270 = vmul.u32.u64.compose %v266, %v261
        %v271 = vextract.low.u32 %v270
        %v272 = vextract.high.u32 %v270
        %v273 = vmul.u32 %v266, %v257
        %v274 = vadd.s32 %v269, %v271
        %vm275 = vc.u32 %v269, %v271
        %v276 = vadd.s32 %v272, 1
        %v277 = vsel %vm275, %v276, %v272
        %v278 = vadd.s32 %v273, %v277
        %v279 = vadd.s32 %v278, 536870912
        %v280 = vshrl.u32 %v279, 30
        %v281 = vshll.u32 %v280, 30
        %v282 = vsub.s32 %v278, %v281
        %vm283 = vcmp.lt.s32.totalorder %v282, 0
        %v284 = vsub.s32 0, %v282
        %v285 = vsel %vm283, %v284, %v282
        %v286 = vclz %v285
        %v287 = vsub.s32 %v286, 2
        %vm288 = vcmp.gt.s32.totalorder 0, %v287
        %v289 = vsel %vm288, 0, %v287
        %v290 = vsub.s32 32, %v289
        %v291 = vshll.u32 %v282, %v289
        %v292 = vshrl.u32 %v274, %v290
        %v293 = vor.u32 %v291, %v292
        %v294 = vsub.s32 4294967266, %v289
        %v295 = vadd.s32 %v294, 127
        %v296 = vshll.u32 %v295, 23
        %v297 = vor.u32 4788187, %v296
        %v298 = vand.u32 2147483647, %v297
        %v300 = vcvt.s32.f32 %v293
        %v301 = vmul.f32 %v300, %v298
        %v302 = vxor.u32 %v301, 2147483648
        %v303 = vsel %vm220, %v302, %v301
        %v304 = vsub.s32 4, %v280
        %v305 = vsel %vm220, %v304, %v280
        %v306 = vsel %vm219, %v216, %v303
        %v307 = vsel %vm219, 0, %v305
        %v308 = vcosq.f32.pop %v306
        %v309 = vsinq.f32.pop %v306
        %vm310 = vweird.f32 %v216
        %v311 = vadd.s32 %v307, 3
        %v312 = vand.u32 %v311, 3
        %vm313 = vcmp.lt.s32.totalorder %v312, 2
        %vm314 = vcmp.eq.s32.totalorder %v312, 0
        %v315 = vxor.u32 %v309, 2147483648
        %v316 = vsel %vm314, %v308, %v315
        %vm317 = vcmp.eq.s32.totalorder %v312, 2
        %v318 = vxor.u32 %v308, 2147483648
        %v319 = vsel %vm317, %v318, %v309
        %v320 = vsel %vm313, %v316, %v319
        %v321 = vsel %vm310, nan, %v320
        %v322 = vand.u32 2147483647, %v217
        %vm323 = vcmp.le.f32.partialorder %v322, 0.7853982
        %vm324 = vcmp.lt.s32.totalorder %v217, 0
        %v325 = vand.u32 %v217, 2139095040
        %v326 = vshrl.u32 %v325, 23
        %v327 = vsub.s32 %v326, 127
        %v328 = vand.u32 2147483647, %v217
        %v329 = vand.u32 %v328, 8388607
        %v330 = vor.u32 %v329, 8388608
        %v331 = vsub.s32 0, %v330
        %v332 = vadd.s32 %v327, 1
        %vm333 = vcmp.gt.s32.totalorder %v332, 0
        %v334 = vsel %vm333, %v332, 0
        %v335 = vshrl.u32 %v334, 5
        %v336 = vand.u32 %v334, 31
        %v337 = vsub.s32 32, %v336
        %v338 = vshrl.u32 683565275, %v337
        %v339 = vshll.u32 683565275, %v336
        %v340 = vshrl.u32 2475754826, %v337
        %v341 = vor.u32 %v339, %v340
        %v342 = vshll.u32 2475754826, %v336
        %v343 = vshrl.u32 2131351028, %v337
        %v344 = vor.u32 %v342, %v343
        %v345 = vshll.u32 2131351028, %v336
        %v346 = vshrl.u32 2102212464, %v337
        %v347 = vor.u32 %v345, %v346
        %v348 = vshll.u32 2102212464, %v336
        %v349 = vshrl.u32 920167782, %v337
        %v350 = vor.u32 %v348, %v349
        %v351 = vshll.u32 920167782, %v336
        %v352 = vshrl.u32 1326507024, %v337
        %v353 = vor.u32 %v351, %v352
        %vm354 = vcmp.lt.s32.totalorder %v335, 1
        %vm355 = vcmp.lt.s32.totalorder %v335, 2
        %vm356 = vcmp.lt.s32.totalorder %v335, 3
        %vm357 = vcmp.lt.s32.totalorder %v335, 4
        %v358 = vsel %vm354, %v338, %v341
        %v359 = vsel %vm357, %v347, 2102212464
        %v360 = vsel %vm356, %v344, %v359
        %v361 = vsel %vm355, %v358, %v360
        %v362 = vsel %vm354, %v341, %v344
        %v363 = vsel %vm357, %v350, 920167782
        %v364 = vsel %vm356, %v347, %v363
        %v365 = vsel %vm355, %v362, %v364
        %v366 = vsel %vm354, %v344, %v347
        %v367 = vsel %vm357, %v353, 1326507024
        %v368 = vsel %vm356, %v350, %v367
        %v369 = vsel %vm355, %v366, %v368
        %v370 = vshll.u32 %v330, 8
        %v371 = vmul.u32.u64.compose %v370, %v369
        %v372 = vextract.low.u32 %v371
        %v373 = vextract.high.u32 %v371
        %v374 = vmul.u32.u64.compose %v370, %v365
        %v375 = vextract.low.u32 %v374
        %v376 = vextract.high.u32 %v374
        %v377 = vmul.u32 %v370, %v361
        %v378 = vadd.s32 %v373, %v375
        %vm379 = vc.u32 %v373, %v375
        %v380 = vadd.s32 %v376, 1
        %v381 = vsel %vm379, %v380, %v376
        %v382 = vadd.s32 %v377, %v381
        %v383 = vadd.s32 %v382, 536870912
        %v384 = vshrl.u32 %v383, 30
        %v385 = vshll.u32 %v384, 30
        %v386 = vsub.s32 %v382, %v385
        %vm387 = vcmp.lt.s32.totalorder %v386, 0
        %v388 = vsub.s32 0, %v386
        %v389 = vsel %vm387, %v388, %v386
        %v390 = vclz %v389
        %v391 = vsub.s32 %v390, 2
        %vm392 = vcmp.gt.s32.totalorder 0, %v391
        %v393 = vsel %vm392, 0, %v391
        %v394 = vsub.s32 32, %v393
        %v395 = vshll.u32 %v386, %v393
        %v396 = vshrl.u32 %v378, %v394
        %v397 = vor.u32 %v395, %v396
        %v398 = vsub.s32 4294967266, %v393
        %v399 = vadd.s32 %v398, 127
        %v400 = vshll.u32 %v399, 23
        %v401 = vor.u32 4788187, %v400
        %v402 = vand.u32 2147483647, %v401
        %v404 = vcvt.s32.f32 %v397
        %v405 = vmul.f32 %v404, %v402
        %v406 = vxor.u32 %v405, 2147483648
        %v407 = vsel %vm324, %v406, %v405
        %v408 = vsub.s32 4, %v384
        %v409 = vsel %vm324, %v408, %v384
        %v410 = vsel %vm323, %v217, %v407
        %v411 = vsel %vm323, 0, %v409
        %v412 = vcosq.f32.pop %v410
        %v413 = vsinq.f32.pop %v410
        %vm414 = vweird.f32 %v217
        %v415 = vadd.s32 %v411, 3
        %v416 = vand.u32 %v415, 3
        %vm417 = vcmp.lt.s32.totalorder %v416, 2
        %vm418 = vcmp.eq.s32.totalorder %v416, 0
        %v419 = vxor.u32 %v413, 2147483648
        %v420 = vsel %vm418, %v412, %v419
        %vm421 = vcmp.eq.s32.totalorder %v416, 2
        %v422 = vxor.u32 %v412, 2147483648
        %v423 = vsel %vm421, %v422, %v413
        %v424 = vsel %vm417, %v420, %v423
        %v425 = vsel %vm414, nan, %v424
        %426 = vst [vmem:[%s198] sm:$0xff] %v321
        %427 = vst [vmem:[%s198 + $0x8] sm:$0xff] %v425
        %s428 = sand.u32 %s96, 1
        %s429 = scalar_lea.sflag [#allocation4], %s428
        %s430 = sand.u32 %s96, 1
        %s431 = smul.addr %s430, 16
        %s432 = scalar_lea.vmem [#allocation7], %s431
        // Predicated region
        $region37: #{tpu_custom_call.1} parent=27 // pred_check
          %p433 = pneg %p106
        $region38: #{tpu_custom_call.1} parent=27 // pred_check_branch
          %435 = sbr.rel (%p433) target = $region40
        $region39: #{tpu_custom_call.1} parent=27 // pred_region
          %s436 = smul.u32 2, %s25
          %s438 = ssub.s32 256, 256
          %439 = vsyncadd %s429, %s438
          %s440 = smul.addr %s24, 2
          %s441 = sadd.s32 %s436, %s440
          %s442 = smul.addr %s441, 128
          %s443 = scalar_lea.hbm %s2, %s442
          %s445 = sshll.u32 %s432, 4
          %s446 = int_to_ptr.vmem [resolvable:$true] %s445
          %448 = dma.vmem_to_hbm [thread:$0]  %s446, 256, %s443, %s429
        $region40: #{tpu_custom_call.1} parent=27 // pred_fallthru
          _
      $region28: #{tpu_custom_call.1} parent=5 // pred_fallthru
        _
      %p449 = scmp.le.s32.totalorder 2, %s15
      // Predicated region
      $region41: #{tpu_custom_call.1} parent=5 // pred_check
        %p450 = pneg %p449
      $region42: #{tpu_custom_call.1} parent=5 // pred_check_branch
        %452 = sbr.rel (%p450) target = $region44
      $region43: #{tpu_custom_call.1} parent=5 // pred_region
        %s453 = ssub.s32 %s15, 2
        // Predicated region
        $region45: #{tpu_custom_call.1} parent=43 // pred_check
          %p454 = pneg %p112
        $region46: #{tpu_custom_call.1} parent=43 // pred_check_branch
          %456 = sbr.rel (%p454) target = $region48
        $region47: #{tpu_custom_call.1} parent=43 // pred_region
          %s457 = sand.u32 %s97, 1
          %s458 = scalar_lea.sflag [#allocation4], %s457
          %s459 = sand.u32 %s97, 1
          %s460 = smul.addr %s459, 16
          %s461 = scalar_lea.vmem [#allocation7], %s460
          %462 = dma.done %s458, 256
        $region48: #{tpu_custom_call.1} parent=43 // pred_fallthru
          _
      $region44: #{tpu_custom_call.1} parent=5 // pred_fallthru
        _
    $region6: #{tpu_custom_call.1} parent=1 // loop_footer
      %s19 = sadd.s32 1, %s15
    $region7: #{tpu_custom_call.1} parent=1 // loop_footer_branch
      %14 = sbr.rel target = $region3
    $region8: #{tpu_custom_call.1} parent=1 // loop_exit
      _
    %463 = vsyncpa [#allocation3], 1
    %s464 = scalar_lea.sflag [#allocation3], 1
    %465 = vsyncpa %s464, 1
    %466 = vsyncpa [#allocation6], 1
    %s467 = scalar_lea.sflag [#allocation6], 1
    %468 = vsyncpa %s467, 1
    %469 = vsyncpa [#allocation4], 1
    %s470 = scalar_lea.sflag [#allocation4], 1
    %471 = vsyncpa %s470, 1

</llo_original>
